<compile_context>
chip_gen: v7x
topology: tpu7x:2x2x1
jax: 0.10.0
libtpu: 0.0.40
codegen_flags: <defaults>
</compile_context>

<pallas_src>
import functools
import math

import jax
import jax.numpy as jnp
from jax.experimental import pallas as pl
from jax.experimental.pallas import tpu as pltpu


# ---------------------------------------------------------------------------
# Buffer construction (plain JAX glue, deterministic) — matches the PyTorch module
# ---------------------------------------------------------------------------
def make_positional_encoding(max_len: int, d_model: int) -> jnp.ndarray:
    position = jnp.arange(0, max_len, dtype=jnp.float32)[:, None]            # (L, 1)
    div_term = jnp.exp(
        jnp.arange(0, d_model, 2, dtype=jnp.float32)
        * -(math.log(10000.0) / d_model)
    )                                                                         # (D/2,)
    angles = position * div_term                                              # (L, D/2)
    pe = jnp.zeros((max_len, d_model), dtype=jnp.float32)
    pe = pe.at[:, 0::2].set(jnp.sin(angles))
    pe = pe.at[:, 1::2].set(jnp.cos(angles))
    return pe


# ---------------------------------------------------------------------------
# Pallas kernel: y = dropout(x + pe) on lane-dense (TILE_B, TILE_SD) tiles
# ---------------------------------------------------------------------------
def _pe_dropout_kernel(seed_ref, x_ref, pe_ref, o_ref, *, p: float, train: bool,
                       threshold: int, tile_b: int, tile_sd: int, row_stride: int):
    # Hot path: elementwise add; PE tile (1, TILE_SD) broadcasts over batch rows.
    y = x_ref[...] + pe_ref[...]

    if train and 0.0 < p < 1.0:
        j = pl.program_id(0)                      # tile index along flattened seq*d_model
        i = pl.program_id(1)                      # tile index along batch
        # Hoisted row term: (TILE_B, 1) column — sublane-sized ops, essentially free.
        row = jax.lax.broadcasted_iota(jnp.int32, (tile_b, 1), 0)
        rowbase = ((row + i * tile_b).astype(jnp.uint32) * jnp.uint32(row_stride)
                   ) ^ seed_ref[0].astype(jnp.uint32)
        # Column ids on the full tile; broadcast-add the row base (1 VALU add/elem).
        col = jax.lax.broadcasted_iota(jnp.int32, (tile_b, tile_sd), 1)
        h = rowbase + (col + j * tile_sd).astype(jnp.uint32)
        # lowbias32-style mix of the GLOBAL element id: mask is tiling-independent.
        h = h ^ (h >> 16)
        h = h * jnp.uint32(0x7FEB352D)
        h = h ^ (h >> 15)
        h = h * jnp.uint32(0x846CA68B)
        h = h ^ (h >> 16)
        keep = h >= jnp.uint32(threshold)         # P(drop) = threshold / 2^32 ≈ p
        scale = jnp.float32(1.0 / (1.0 - p))
        # Scale in f32, single cast at the store (avoids bf16 scale rounding bias).
        y = y.astype(jnp.float32) * jnp.where(keep, scale, jnp.float32(0.0))

    o_ref[...] = y.astype(o_ref.dtype)


# ---------------------------------------------------------------------------
# Tiling helpers
# ---------------------------------------------------------------------------
_TARGET_BLOCK_BYTES = 2 << 20     # ~2 MiB x/out blocks: at the HBM-roofline knee
_MAX_TILE_SD = _TARGET_BLOCK_BYTES // 32   # = 65536; multiple of 128 for any dtype


def _choose_tile_sd(sd: int, max_tile: int) -> int:
    """Lane-axis tile: full axis if it fits, else a near-divisor multiple of 128."""
    if sd <= max_tile:
        return sd
    best = None
    n_min = -(-sd // max_tile)                              # ceil(sd / max_tile)
    for n in range(n_min, n_min + 16):
        tile = -(-sd // (n * 128)) * 128                    # ceil(sd/n) rounded to 128
        if tile > max_tile:
            continue
        pad = tile * n - sd
        if best is None or pad < best[0] or (pad == best[0] and tile > best[1]):
            best = (pad, tile)
        if pad == 0:
            break
    return best[1] if best is not None else max_tile


# ---------------------------------------------------------------------------
# Wrapper
# ---------------------------------------------------------------------------
def positional_encoding_forward(x, pe, *, dropout_p: float = 0.1,
                                train: bool = True, seed: int = 0):
    """x: (B, S, D); pe: (max_len, D). Returns dropout(x + pe[:S]) with shape (B, S, D)."""
    B, S, D = x.shape
    SD = S * D
    p = float(dropout_p)

    # Degenerate case handled entirely in the wrapper: no HBM reads, no kernel.
    if train and p >= 1.0:
        return jnp.zeros_like(x)

    x2 = x.reshape(B, SD)                                    # lane-dense 2D view
    pe_flat = pe[:S].reshape(1, SD).astype(x.dtype)          # shared over batch

    itemsize = jnp.dtype(x.dtype).itemsize
    sub = max(8, 32 // itemsize)                             # sublane packing factor

    # Lane-axis tile: divisor-aware multiple of 128 (or the full axis).
    TILE_SD = _choose_tile_sd(SD, _MAX_TILE_SD)
    # Batch-axis tile: scale so x block lands near the ~2 MiB roofline knee.
    if B <= sub:
        TILE_B = B
    else:
        tb = max(int(_TARGET_BLOCK_BYTES // (TILE_SD * itemsize)), sub)
        TILE_B = min(B, (tb // sub) * sub)
    n_sd = pl.cdiv(SD, TILE_SD)
    n_b = pl.cdiv(B, TILE_B)

    # Guarantee >= 2 parallel tiles when splittable (v7x has 2 TensorCores/chip).
    if n_sd * n_b == 1 and SD >= 256 and SD % 256 == 0:
        TILE_SD = SD // 2
        n_sd = 2

    threshold = min(max(int(round(p * float(2 ** 32))), 0), 2 ** 32 - 1)
    kernel = functools.partial(
        _pe_dropout_kernel, p=p, train=bool(train), threshold=threshold,
        tile_b=TILE_B, tile_sd=TILE_SD, row_stride=SD)
    seed_arr = jnp.array([seed], dtype=jnp.int32)

    # VMEM limit from the actual footprint: 2x double-buffered (x + out) + 2x PE.
    block_bytes = TILE_B * TILE_SD * itemsize
    pe_bytes = TILE_SD * itemsize
    vmem_limit = 4 * block_bytes + 2 * pe_bytes + (4 << 20)
    vmem_limit = int(max(min(vmem_limit, 56 << 20), 8 << 20))  # fits v7x's 64 MiB

    y2 = pl.pallas_call(
        kernel,
        out_shape=jax.ShapeDtypeStruct((B, SD), x.dtype),
        grid_spec=pltpu.PrefetchScalarGridSpec(
            num_scalar_prefetch=1,                 # seed lands in SMEM
            grid=(n_sd, n_b),                      # batch innermost -> PE tile resident
            in_specs=[
                pl.BlockSpec((TILE_B, TILE_SD), lambda j, i, seed: (i, j)),  # x tile
                pl.BlockSpec((1, TILE_SD),      lambda j, i, seed: (0, j)),  # PE tile
            ],
            out_specs=pl.BlockSpec((TILE_B, TILE_SD), lambda j, i, seed: (i, j)),
        ),
        compiler_params=pltpu.CompilerParams(
            dimension_semantics=("parallel", "parallel"),   # independent tiles
            vmem_limit_bytes=vmem_limit,
        ),
    )(seed_arr, x2, pe_flat)
    return y2.reshape(B, S, D)


if __name__ == "__main__":
    # Small shapes consistent with the module: batch=2, seq=8, d_model=32, max_len=16
    B, S, D, MAX_LEN = 2, 8, 32, 16
    DROPOUT_P = 0.1

    key = jax.random.PRNGKey(0)
    x = jax.random.normal(key, (B, S, D), dtype=jnp.float32)
    pe = make_positional_encoding(MAX_LEN, D)

    # Eval mode (dropout disabled) — exact semantics vs reference.
    y_eval = jax.block_until_ready(
        positional_encoding_forward(x, pe, dropout_p=DROPOUT_P, train=False))
    ref = x + pe[None, :S, :]
    assert jnp.allclose(y_eval, ref, atol=1e-6), "eval-mode mismatch"

    # Train mode — every output must be 0 or (x + pe) / (1 - p) (inverted dropout).
    y_train = jax.block_until_ready(
        positional_encoding_forward(x, pe, dropout_p=DROPOUT_P, train=True, seed=0))
    assert y_train.shape == (B, S, D)
    scaled = ref / (1.0 - DROPOUT_P)
    ok = jnp.isclose(y_train, 0.0, atol=1e-6) | jnp.isclose(y_train, scaled,
                                                            rtol=1e-5, atol=1e-6)
    assert bool(jnp.all(ok)), "train-mode values not in {0, (x+pe)/(1-p)}"

    # Degenerate p >= 1 path (handled in the wrapper, no kernel launch).
    y_all_drop = jax.block_until_ready(
        positional_encoding_forward(x, pe, dropout_p=1.0, train=True, seed=0))
    assert bool(jnp.all(y_all_drop == 0.0)), "p>=1 should drop everything"

    print("KERNEL_OK")
</pallas_src>

<mosaic_0001>
module attributes {stable_mosaic.version = 11 : i64} {
  func.func @_pe_dropout_kernel(%arg0: i32, %arg1: i32, %arg2: memref<1xi32, #tpu.memory_space<smem>>, %arg3: memref<2x128xf32, #tpu.memory_space<vmem>>, %arg4: memref<1x128xf32, #tpu.memory_space<vmem>>, %arg5: memref<2x128xf32, #tpu.memory_space<vmem>>) attributes {dimension_semantics = [#tpu.dimension_semantics<parallel>, #tpu.dimension_semantics<parallel>], iteration_bounds = array<i64: 2, 1>, scalar_prefetch = 1 : i64, scratch_operands = 0 : i64, tpu.core_type = #tpu.core_type<tc>, window_params = [{transform_indices = @transform_0, window_bounds = array<i64: 2, 128>}, {transform_indices = @transform_1, window_bounds = array<i64: 1, 128>}, {transform_indices = @transform_2, window_bounds = array<i64: 2, 128>}]} {
    %c0 = arith.constant 0 : index
    %c0_0 = arith.constant 0 : index
    %0 = vector.load %arg3[%c0, %c0_0] : memref<2x128xf32, #tpu.memory_space<vmem>>, vector<2x128xf32>
    %c0_1 = arith.constant 0 : index
    %c0_2 = arith.constant 0 : index
    %1 = vector.load %arg4[%c0_1, %c0_2] : memref<1x128xf32, #tpu.memory_space<vmem>>, vector<1x128xf32>
    %2 = vector.broadcast %1 : vector<1x128xf32> to vector<2x128xf32>
    %3 = arith.addf %0, %2 : vector<2x128xf32>
    %c0_3 = arith.constant 0 : index
    %c0_4 = arith.constant 0 : index
    %4 = vector.load %arg5[%c0_3, %c0_4] : memref<2x128xf32, #tpu.memory_space<vmem>>, vector<2x128xf32>
    tpu.vector_store %arg5[%c0_3, %c0_4], %3 {strides = array<i32>} : memref<2x128xf32, #tpu.memory_space<vmem>>, vector<2x128xf32>,
    return
  }
  func.func @transform_0(%arg0: i32, %arg1: i32, %arg2: memref<1xi32, #tpu.memory_space<smem>>) -> (i32, i32) {
    %c0_i32 = arith.constant 0 : i32
    return %arg1, %arg0 : i32, i32
  }
  func.func @transform_1(%arg0: i32, %arg1: i32, %arg2: memref<1xi32, #tpu.memory_space<smem>>) -> (i32, i32) {
    %c0_i32 = arith.constant 0 : i32
    %c0_i32_0 = arith.constant 0 : i32
    return %c0_i32, %arg0 : i32, i32
  }
  func.func @transform_2(%arg0: i32, %arg1: i32, %arg2: memref<1xi32, #tpu.memory_space<smem>>) -> (i32, i32) {
    %c0_i32 = arith.constant 0 : i32
    return %arg1, %arg0 : i32, i32
  }
}

</mosaic_0001>

<llo_original>
// kernel: tpu_custom_call.1
$region0: #{tpu_custom_call.1}
  #allocation0 [shape = 'u32[]', space=smem, size = 0x4, offset = 0x4, fixed_abs, tag = 'smem constant byte address 0x4 - core index']
  #allocation1 [shape = 'u32[144,128]{1,0:T(1,128)}', space=vmem, size = 0x12000, scoped, tag = 'internal scratch']
  #allocation2 [shape = 's32[1]{0}', space=sflag, size = 0x4, scoped, tag = 'scoped memory for tpu_custom_call.1']
  #allocation3 [shape = 's32[1]{0:T(128)S(6)}', space=smem, size = 0x200, scoped, tag = 'prefetched SMEM operand 0']
  %s0 = inlined_call_operand.<no memory space> [shape: s32[1], index: 0, kind: input, shape index: {}]
  %s1 = inlined_call_operand.hbm [shape: f32[2,256], index: 1, kind: input, shape index: {}]
  %s2 = inlined_call_operand.vmem [shape: f32[1,256], index: 2, kind: input, shape index: {}]
  %s3 = inlined_call_operand.hbm [shape: f32[2,256], index: 3, kind: output, shape index: {}]
  %s4 = sld [smem:[#allocation0]]
  $region45: #{tpu_custom_call.1} parent=0
    _
  %s6 = ssub.s32 1, %s4
  %s7 = scalar_select 0, %s6, %s4
  %8 = sst [smem:[#allocation3]] %s0
  $region1: #{tpu_custom_call.1} parent=0
    #allocation4 [shape = 'u8[2048]{0}', space=vmem, size = 0x800, scoped, tag = 'input window, operand 1']
    #allocation5 [shape = 's32[2]{0}', space=sflag, size = 0x8, scoped, tag = 'scoped memory for tpu_custom_call.1']
    #allocation6 [shape = 's32[2]{0}', space=sflag, size = 0x8, scoped, tag = 'scoped memory for tpu_custom_call.1']
    #allocation7 [shape = 'u8[2048]{0}', space=vmem, size = 0x800, scoped, tag = 'output window, operand 0']
    %9 = vsyncpa [#allocation5], 0
    %s10 = scalar_lea.sflag [#allocation5], 1
    %11 = vsyncpa %s10, 0
    %12 = vsyncpa [#allocation6], 0
    %s13 = scalar_lea.sflag [#allocation6], 1
    %14 = vsyncpa %s13, 0
    loop: start=0, step=1, limit=4
    $region2: #{tpu_custom_call.1} parent=1 // loop_pre_header
      _
    $region3: #{tpu_custom_call.1} parent=1 // loop_header
      %s16 = sphi 0, %s20
      %p17 = scmp.ge.s32.totalorder %s16, 4
      %s23 = sphi 0, %s35
      %s24 = sphi 0, %s31
      %s25 = sphi 0, %s23
      %s26 = sphi 0, %s24
      %s27 = sphi 0, %s25
      %s28 = sphi 0, %s26
      %s40 = sphi 0, %s42
      %s43 = sphi 0, %s40
      %s44 = sphi 0, %s43
      %s60 = sphi 0, %s44
      %s66 = sphi 0, %s68
      %s69 = sphi 0, %s66
      %s70 = sphi 0, %s69
      %s86 = sphi 0, %s70
      %s94 = sphi 0, %s96
      %s97 = sphi 0, %s94
      %s98 = sphi 0, %s97
      %s114 = sphi 0, %s98
    $region4: #{tpu_custom_call.1} parent=1 // loop_header_branch
      %19 = sbr.rel (%p17) target = $region8
    $region5: #{tpu_custom_call.1} parent=1 // loop_body
      %s21 = ssub.s32 %s16, 1
      %s22 = ssub.s32 %s16, 2
      %s29 = sadd.s32 1, %s24
      %p30 = scmp.ge.s32.totalorder %s29, 1
      %s31 = scalar_select %p30, 0, %s29
      %s32 = sadd.s32 1, %s23
      %s33 = scalar_select %p30, %s32, %s23
      %p34 = scmp.ge.s32.totalorder %s33, 2
      %s35 = scalar_select %p34, 0, %s33
      %s36 = ssub.s32 %s24, %s31
      %s37 = ssub.s32 %s23, %s35
      %s38 = sor.u32 %s36, %s37
      %p39 = scmp.eq.s32.totalorder %s38, 0
      %s41 = sadd.s32 %s40, 1
      %s42 = scalar_select %p39, %s40, %s41
      %p45 = pneg %p39
      %p46 = scmp.eq.s32.totalorder %s16, 1
      %p47 = por %p45, %p46
      %p48 = scmp.ne.s32.totalorder %s40, %s43
      %p49 = scmp.eq.s32.totalorder %s16, 0
      %p50 = por %p48, %p49
      %p51 = scmp.ne.s32.totalorder %s40, %s43
      %p52 = scmp.eq.s32.totalorder %s21, 1
      %p53 = por %p51, %p52
      %p54 = scmp.ne.s32.totalorder %s43, %s44
      %p55 = scmp.eq.s32.totalorder %s21, 0
      %p56 = por %p54, %p55
      %p57 = scmp.ne.s32.totalorder %s43, %s44
      %p58 = scmp.eq.s32.totalorder %s22, 1
      %p59 = por %p57, %p58
      %p61 = scmp.ne.s32.totalorder %s44, %s60
      %p62 = scmp.eq.s32.totalorder %s22, 0
      %p63 = por %p61, %p62
      %s64 = ssub.s32 %s23, %s35
      %p65 = scmp.eq.s32.totalorder %s64, 0
      %s67 = sadd.s32 %s66, 1
      %s68 = scalar_select %p65, %s66, %s67
      %p71 = pneg %p65
      %p72 = scmp.eq.s32.totalorder %s16, 1
      %p73 = por %p71, %p72
      %p74 = scmp.ne.s32.totalorder %s66, %s69
      %p75 = scmp.eq.s32.totalorder %s16, 0
      %p76 = por %p74, %p75
      %p77 = scmp.ne.s32.totalorder %s66, %s69
      %p78 = scmp.eq.s32.totalorder %s21, 1
      %p79 = por %p77, %p78
      %p80 = scmp.ne.s32.totalorder %s69, %s70
      %p81 = scmp.eq.s32.totalorder %s21, 0
      %p82 = por %p80, %p81
      %p83 = scmp.ne.s32.totalorder %s69, %s70
      %p84 = scmp.eq.s32.totalorder %s22, 1
      %p85 = por %p83, %p84
      %p87 = scmp.ne.s32.totalorder %s70, %s86
      %p88 = scmp.eq.s32.totalorder %s22, 0
      %p89 = por %p87, %p88
      %s90 = ssub.s32 %s24, %s31
      %s91 = ssub.s32 %s23, %s35
      %s92 = sor.u32 %s90, %s91
      %p93 = scmp.eq.s32.totalorder %s92, 0
      %s95 = sadd.s32 %s94, 1
      %s96 = scalar_select %p93, %s94, %s95
      %p99 = pneg %p93
      %p100 = scmp.eq.s32.totalorder %s16, 1
      %p101 = por %p99, %p100
      %p102 = scmp.ne.s32.totalorder %s94, %s97
      %p103 = scmp.eq.s32.totalorder %s16, 0
      %p104 = por %p102, %p103
      %p105 = scmp.ne.s32.totalorder %s94, %s97
      %p106 = scmp.eq.s32.totalorder %s21, 1
      %p107 = por %p105, %p106
      %p108 = scmp.ne.s32.totalorder %s97, %s98
      %p109 = scmp.eq.s32.totalorder %s21, 0
      %p110 = por %p108, %p109
      %p111 = scmp.ne.s32.totalorder %s97, %s98
      %p112 = scmp.eq.s32.totalorder %s22, 1
      %p113 = por %p111, %p112
      %p115 = scmp.ne.s32.totalorder %s98, %s114
      %p116 = scmp.eq.s32.totalorder %s22, 0
      %p117 = por %p115, %p116
      %p118 = scmp.le.s32.totalorder 1, %s16
      %p119 = scmp.lt.s32.totalorder %s16, 3
      %p120 = pnand %p118, %p119
      %p121 = pneg %p120
      // Predicated region
      $region9: #{tpu_custom_call.1} parent=5 // pred_check
        _
      $region10: #{tpu_custom_call.1} parent=5 // pred_check_branch
        %123 = sbr.rel (%p120) target = $region12
      $region11: #{tpu_custom_call.1} parent=5 // pred_region
        %s124 = ssub.s32 %s16, 1
      $region12: #{tpu_custom_call.1} parent=5 // pred_fallthru
        _
      %p125 = scmp.lt.s32.totalorder %s16, 2
      // Predicated region
      $region13: #{tpu_custom_call.1} parent=5 // pred_check
        %p126 = pneg %p125
      $region14: #{tpu_custom_call.1} parent=5 // pred_check_branch
        %128 = sbr.rel (%p126) target = $region16
      $region15: #{tpu_custom_call.1} parent=5 // pred_region
        // Predicated region
        $region17: #{tpu_custom_call.1} parent=15 // pred_check
          %p129 = pneg %p50
        $region18: #{tpu_custom_call.1} parent=15 // pred_check_branch
          %131 = sbr.rel (%p129) target = $region20
        $region19: #{tpu_custom_call.1} parent=15 // pred_region
          %s132 = sand.u32 %s40, 1
          %s133 = scalar_lea.sflag [#allocation5], %s132
          %s134 = sand.u32 %s40, 1
          %s135 = smul.addr %s134, 2
          %s136 = scalar_lea.vmem [#allocation4], %s135
          %s138 = ssub.s32 32, 32
          %139 = vsyncadd %s133, %s138
          %s140 = smul.addr %s24, 2
          %s141 = sadd.s32 %s23, %s140
          %s142 = smul.addr %s141, 32
          %s143 = scalar_lea.hbm %s1, %s142
          %s145 = sshll.u32 %s136, 4
          %s146 = int_to_ptr.vmem [resolvable:$true] %s145
          %148 = dma.hbm_to_vmem [thread:$0]  %s143, 32, %s146, %s133
        $region20: #{tpu_custom_call.1} parent=15 // pred_fallthru
          _
        // Predicated region
        $region21: #{tpu_custom_call.1} parent=15 // pred_check
          %p149 = pneg %p76
        $region22: #{tpu_custom_call.1} parent=15 // pred_check_branch
          %151 = sbr.rel (%p149) target = $region24
        $region23: #{tpu_custom_call.1} parent=15 // pred_region
          %p152 = scmp.lt.s32.totalorder %s23, 1
          %s153 = scalar_select %p152, %s23, 1
          %s154 = scalar_lea.vmem %s2, %s153
        $region24: #{tpu_custom_call.1} parent=15 // pred_fallthru
          _
      $region16: #{tpu_custom_call.1} parent=5 // pred_fallthru
        _
      %p155 = scmp.le.s32.totalorder 1, %s16
      %p156 = scmp.lt.s32.totalorder %s16, 3
      %p157 = pnand %p155, %p156
      %p158 = pneg %p157
      // Predicated region
      $region25: #{tpu_custom_call.1} parent=5 // pred_check
        _
      $region26: #{tpu_custom_call.1} parent=5 // pred_check_branch
        %160 = sbr.rel (%p157) target = $region28
      $region27: #{tpu_custom_call.1} parent=5 // pred_region
        %s161 = ssub.s32 %s16, 1
        %s162 = sand.u32 %s43, 1
        %s163 = scalar_lea.sflag [#allocation5], %s162
        %s164 = sand.u32 %s43, 1
        %s165 = smul.addr %s164, 2
        %s166 = scalar_lea.vmem [#allocation4], %s165
        // Predicated region
        $region29: #{tpu_custom_call.1} parent=27 // pred_check
          %p167 = pneg %p56
        $region30: #{tpu_custom_call.1} parent=27 // pred_check_branch
          %169 = sbr.rel (%p167) target = $region32
        $region31: #{tpu_custom_call.1} parent=27 // pred_region
          %170 = dma.done %s163, 32
        $region32: #{tpu_custom_call.1} parent=27 // pred_fallthru
          _
        %s171 = sand.u32 %s43, 1
        %s172 = scalar_lea.sflag [#allocation5], %s171
        %s173 = sand.u32 %s43, 1
        %s174 = smul.addr %s173, 2
        %s175 = scalar_lea.vmem [#allocation4], %s174
        %p176 = pneg %p56
        %p177 = pneg %p53
        %p178 = scmp.lt.s32.totalorder %s25, 1
        %s179 = scalar_select %p178, %s25, 1
        %s180 = scalar_lea.vmem %s2, %s179
        %p181 = pneg %p82
        %p182 = pneg %p79
        %p183 = pneg %p110
        %p184 = pneg %p107
        %s185 = sand.u32 %s97, 1
        %s186 = scalar_lea.sflag [#allocation6], %s185
        %s187 = sand.u32 %s97, 1
        %s188 = smul.addr %s187, 2
        %s189 = scalar_lea.vmem [#allocation7], %s188
        %p190 = scmp.lt.s32.totalorder %s25, 1
        %s191 = scalar_select %p190, %s25, 1
        %s192 = scalar_lea.vmem %s2, %s191
        %v193 = vld [vmem:[%s166] sm:$0x3]
        %v194 = vld [vmem:[%s192] sm:$0x1]
        %v196 = vlaneseq
        %v197 = vshrl.u32 %v196, 7
        %v198 = vsub.s32 0, %v197
        %v199 = vrot.slane %v194, %v198
        %v201 = vadd.f32 %v193, %v199
        %202 = vst [vmem:[%s189] sm:$0x3] %v201
        %s203 = sand.u32 %s97, 1
        %s204 = scalar_lea.sflag [#allocation6], %s203
        %s205 = sand.u32 %s97, 1
        %s206 = smul.addr %s205, 2
        %s207 = scalar_lea.vmem [#allocation7], %s206
        // Predicated region
        $region33: #{tpu_custom_call.1} parent=27 // pred_check
          %p208 = pneg %p107
        $region34: #{tpu_custom_call.1} parent=27 // pred_check_branch
          %210 = sbr.rel (%p208) target = $region36
        $region35: #{tpu_custom_call.1} parent=27 // pred_region
          %s212 = ssub.s32 32, 32
          %213 = vsyncadd %s204, %s212
          %s214 = smul.addr %s26, 2
          %s215 = sadd.s32 %s25, %s214
          %s216 = smul.addr %s215, 32
          %s217 = scalar_lea.hbm %s3, %s216
          %s219 = sshll.u32 %s207, 4
          %s220 = int_to_ptr.vmem [resolvable:$true] %s219
          %222 = dma.vmem_to_hbm [thread:$0]  %s220, 32, %s217, %s204
        $region36: #{tpu_custom_call.1} parent=27 // pred_fallthru
          _
      $region28: #{tpu_custom_call.1} parent=5 // pred_fallthru
        _
      %p223 = scmp.le.s32.totalorder 2, %s16
      // Predicated region
      $region37: #{tpu_custom_call.1} parent=5 // pred_check
        %p224 = pneg %p223
      $region38: #{tpu_custom_call.1} parent=5 // pred_check_branch
        %226 = sbr.rel (%p224) target = $region40
      $region39: #{tpu_custom_call.1} parent=5 // pred_region
        %s227 = ssub.s32 %s16, 2
        // Predicated region
        $region41: #{tpu_custom_call.1} parent=39 // pred_check
          %p228 = pneg %p113
        $region42: #{tpu_custom_call.1} parent=39 // pred_check_branch
          %230 = sbr.rel (%p228) target = $region44
        $region43: #{tpu_custom_call.1} parent=39 // pred_region
          %s231 = sand.u32 %s98, 1
          %s232 = scalar_lea.sflag [#allocation6], %s231
          %s233 = sand.u32 %s98, 1
          %s234 = smul.addr %s233, 2
          %s235 = scalar_lea.vmem [#allocation7], %s234
          %236 = dma.done %s232, 32
        $region44: #{tpu_custom_call.1} parent=39 // pred_fallthru
          _
      $region40: #{tpu_custom_call.1} parent=5 // pred_fallthru
        _
    $region6: #{tpu_custom_call.1} parent=1 // loop_footer
      %s20 = sadd.s32 1, %s16
    $region7: #{tpu_custom_call.1} parent=1 // loop_footer_branch
      %15 = sbr.rel target = $region3
    $region8: #{tpu_custom_call.1} parent=1 // loop_exit
      _
    %237 = vsyncpa [#allocation5], 1
    %s238 = scalar_lea.sflag [#allocation5], 1
    %239 = vsyncpa %s238, 1
    %240 = vsyncpa [#allocation6], 1
    %s241 = scalar_lea.sflag [#allocation6], 1
    %242 = vsyncpa %s241, 1

</llo_original>
